<compile_context>
chip_gen: v6e
topology: v6e:2x2x1
jax: 0.10.0
libtpu: 0.0.40
codegen_flags: <defaults>
</compile_context>

<pallas_src>
import math
import functools

import jax
import jax.numpy as jnp
from jax import lax
from jax.experimental import pallas as pl
from jax.experimental.pallas import tpu as pltpu

_LANE = 128


# ----------------------------------------------------------------------------- PE table
def make_positional_encoding(d_model: int, seq_len: int) -> jnp.ndarray:
    """Build the (seq_len, d_model) sinusoidal table exactly like the PyTorch module."""
    position = jnp.arange(seq_len, dtype=jnp.float32)[:, None]              # (S, 1)
    div_term = jnp.exp(jnp.arange(0, d_model, 2, dtype=jnp.float32)
                       * (-math.log(10000.0) / d_model))                    # (D/2,)
    pe = jnp.zeros((seq_len, d_model), dtype=jnp.float32)
    pe = pe.at[:, 0::2].set(jnp.sin(position * div_term))
    pe = pe.at[:, 1::2].set(jnp.cos(position * div_term))
    return pe


# ----------------------------------------------------------------------------- kernel
def _hash_u32(x):
    """lowbias32 hash (u32 -> u32). Only used on the non-TPU fallback path."""
    x = x ^ (x >> jnp.uint32(16))
    x = x * jnp.uint32(0x7FEB352D)
    x = x ^ (x >> jnp.uint32(15))
    x = x * jnp.uint32(0x846CA68B)
    x = x ^ (x >> jnp.uint32(16))
    return x


def _pe_dropout_kernel(seed_ref, x_ref, pe_ref, o_ref, *,
                       apply_dropout, keep_threshold, inv_keep, use_hw_prng,
                       grid_rank, row_tile, rows_per_batch, lane):
    """One (TR, 128) tile: out = dropout(x + pe).

    seed_ref : SMEM scalar-prefetch ref, shape (1,), int32
    x_ref    : VMEM block (TR, 128)
    pe_ref   : VMEM block (TR, 128)   (resident / reused across steps)
    o_ref    : VMEM block (TR, 128)
    """
    y = x_ref[...] + pe_ref[...]                      # compute in x dtype

    if apply_dropout:
        if grid_rank == 1:
            step = pl.program_id(0)
            row_base = step * jnp.int32(row_tile)
        else:
            r = pl.program_id(0)                      # row-tile index
            b = pl.program_id(1)                      # batch index (inner axis)
            step = r * pl.num_programs(1) + b
            row_base = b * jnp.int32(rows_per_batch) + r * jnp.int32(row_tile)

        if use_hw_prng:
            # Hardware PRNG: dedicated instruction, keeps the kernel memory-bound.
            # Re-seeding per grid step from program ids keeps the mask deterministic
            # regardless of which TensorCore executes the step ("parallel"-safe).
            pltpu.prng_seed(seed_ref[0], step)
            bits = pltpu.bitcast(pltpu.prng_random_bits(y.shape), jnp.uint32)
        else:
            # Portable fallback (non-TPU backends / interpreter tests only).
            # TODO(synk): the u32 global index wraps for tensors with >= 2^32 elements.
            base = row_base.astype(jnp.uint32) * jnp.uint32(lane)
            flat = (lax.broadcasted_iota(jnp.uint32, y.shape, 0) * jnp.uint32(lane)
                    + lax.broadcasted_iota(jnp.uint32, y.shape, 1))
            mixed = seed_ref[0].astype(jnp.uint32) * jnp.uint32(0x9E3779B1)
            bits = _hash_u32((base + flat) ^ mixed)

        keep = bits >= jnp.uint32(keep_threshold)     # P(keep) ~= 1 - p (full 32-bit compare)
        y = jnp.where(keep, y * inv_keep, jnp.zeros_like(y))

    o_ref[...] = y.astype(o_ref.dtype)


# ----------------------------------------------------------------------------- wrapper
def _pe_dropout_pallas(x, pe_slice, *, dropout_p, seed, apply_dropout,
                       budget_bytes=1536 * 1024, use_hw_prng=None):
    """x: (B, S, D); pe_slice: (S, D), already cast to x.dtype."""
    B, S, D = x.shape
    n = S * D
    npad = (-n) % _LANE
    Rn = (n + npad) // _LANE                           # lane-dense rows per batch element

    if use_hw_prng is None:
        use_hw_prng = (jax.default_backend() == "tpu")

    # Lane-dense view: flatten the (S, D) slab and pad it to full 128-lane rows
    # (avoids masked vst.msk stores when S*D is not a multiple of 128).
    xf = x.reshape(B, n)
    pef = pe_slice.reshape(n)
    if npad:
        xf = jnp.pad(xf, ((0, 0), (0, npad)))
        pef = jnp.pad(pef, (0, npad))

    itemsize = jnp.dtype(x.dtype).itemsize
    budget_rows = max(8, budget_bytes // (_LANE * itemsize))

    keep_threshold = min(int(float(dropout_p) * (1 << 32)), (1 << 32) - 1)
    inv_keep = (1.0 / (1.0 - float(dropout_p))) if dropout_p < 1.0 else 0.0
    seed_arr = jnp.array([int(seed) & 0x7FFFFFFF], dtype=jnp.int32)

    common = dict(apply_dropout=bool(apply_dropout) and dropout_p > 0.0,
                  keep_threshold=keep_threshold, inv_keep=inv_keep,
                  use_hw_prng=bool(use_hw_prng), rows_per_batch=Rn, lane=_LANE)
    cparams = dict(vmem_limit_bytes=32 * 1024 * 1024)   # headroom on v5e; fine elsewhere

    # Decide whether batch can be folded into the row axis (small per-batch slab).
    fold_batch = False
    k = 1
    if Rn <= budget_rows:
        k = max(1, min(B, budget_rows // Rn))
        if k == B:
            fold_batch = True                          # tile == full extent, always legal
        else:
            step8 = 8 // math.gcd(Rn, 8)               # make k*Rn a multiple of 8
            k = (k // step8) * step8
            if k >= 1:
                fold_batch = True

    if fold_batch:
        # ---- Path 1: fold batch into the row axis -> one big lane-dense grid axis.
        tr = k * Rn
        rows_total = B * Rn
        xv = xf.reshape(rows_total, _LANE)
        pev = jnp.tile(pef.reshape(Rn, _LANE), (k, 1))          # (tr, 128)
        grid = (pl.cdiv(rows_total, tr),)

        kernel = functools.partial(_pe_dropout_kernel, grid_rank=1, row_tile=tr,
                                   **common)
        out = pl.pallas_call(
            kernel,
            out_shape=jax.ShapeDtypeStruct((rows_total, _LANE), x.dtype),
            grid_spec=pltpu.PrefetchScalarGridSpec(
                num_scalar_prefetch=1,
                grid=grid,
                in_specs=[
                    pl.BlockSpec((tr, _LANE), lambda g, seed_ref: (g, 0)),
                    # Constant block index -> pe is DMA'd once and stays resident.
                    pl.BlockSpec((tr, _LANE), lambda g, seed_ref: (0, 0)),
                ],
                out_specs=pl.BlockSpec((tr, _LANE), lambda g, seed_ref: (g, 0)),
            ),
            compiler_params=pltpu.CompilerParams(
                dimension_semantics=("parallel",), **cparams),
        )(seed_arr, xv, pev)
        out = out.reshape(B, Rn * _LANE)
    else:
        # ---- Path 2: big per-batch slab -> row tiles, batch as the inner grid axis.
        tr = Rn if Rn <= budget_rows else max(8, (budget_rows // 8) * 8)
        xv = xf.reshape(B, Rn, _LANE)
        pev = pef.reshape(Rn, _LANE)
        grid = (pl.cdiv(Rn, tr), B)                    # batch innermost -> pe tile reused

        kernel = functools.partial(_pe_dropout_kernel, grid_rank=2, row_tile=tr,
                                   **common)
        out = pl.pallas_call(
            kernel,
            out_shape=jax.ShapeDtypeStruct((B, Rn, _LANE), x.dtype),
            grid_spec=pltpu.PrefetchScalarGridSpec(
                num_scalar_prefetch=1,
                grid=grid,
                in_specs=[
                    pl.BlockSpec((pl.Squeezed(), tr, _LANE),
                                 lambda r, b, seed_ref: (b, r, 0)),
                    # Depends only on r: constant across the inner batch axis,
                    # so the pe tile is DMA'd once per row tile.
                    pl.BlockSpec((tr, _LANE), lambda r, b, seed_ref: (r, 0)),
                ],
                out_specs=pl.BlockSpec((pl.Squeezed(), tr, _LANE),
                                       lambda r, b, seed_ref: (b, r, 0)),
            ),
            compiler_params=pltpu.CompilerParams(
                dimension_semantics=("parallel", "parallel"), **cparams),
        )(seed_arr, xv, pev)
        out = out.reshape(B, Rn * _LANE)

    if npad:
        out = out[:, :n]
    return out.reshape(B, S, D)


def positional_encoding_forward(x, pe, *, dropout_p=0.0, training=False, seed=0):
    """x: (B, S, D). pe: (S_max, D), S <= S_max. Returns dropout(x + pe[:S])."""
    B, S, D = x.shape
    pe_slice = pe[:S, :].astype(x.dtype)               # bf16 activations -> bf16 pe

    if (not training) or dropout_p == 0.0:
        # Eval / no-dropout: trivially fusable broadcast add -- let XLA fuse it.
        return x + pe_slice[None]
    if dropout_p >= 1.0:                               # guard p == 1
        return jnp.zeros_like(x)

    return _pe_dropout_pallas(x, pe_slice, dropout_p=dropout_p, seed=seed,
                              apply_dropout=True)


# ----------------------------------------------------------------------------- self-test
if __name__ == "__main__":
    d_model, seq_len, batch, dropout_p = 32, 8, 2, 0.1
    key = jax.random.PRNGKey(0)
    x = jax.random.normal(key, (batch, seq_len, d_model), dtype=jnp.float32)
    pe = make_positional_encoding(d_model, seq_len)
    ref = x + pe[None, :, :]

    # 1) Kernel add path (path 1: batch folded into rows) -> exact check.
    out_add = jax.block_until_ready(
        _pe_dropout_pallas(x, pe.astype(x.dtype), dropout_p=0.0, seed=0,
                           apply_dropout=False))
    assert out_add.shape == x.shape and out_add.dtype == x.dtype
    assert jnp.allclose(out_add, ref, atol=1e-6, rtol=1e-6)

    # 2) Path 2 (row tiling + squeezed batch axis), forced via a tiny tile budget.
    x2 = jax.random.normal(jax.random.PRNGKey(1), (2, 16, 128), dtype=jnp.float32)
    pe2 = make_positional_encoding(128, 16)
    ref2 = x2 + pe2[None, :, :]
    out2 = jax.block_until_ready(
        _pe_dropout_pallas(x2, pe2.astype(x2.dtype), dropout_p=0.0, seed=0,
                           apply_dropout=False, budget_bytes=4096))
    assert jnp.allclose(out2, ref2, atol=1e-6, rtol=1e-6)

    # 3) Non-128-divisible slab (padding fallback) -> exact check.
    x3 = jax.random.normal(jax.random.PRNGKey(2), (2, 8, 24), dtype=jnp.float32)
    pe3 = make_positional_encoding(24, 8)
    ref3 = x3 + pe3[None, :, :]
    out3 = jax.block_until_ready(
        _pe_dropout_pallas(x3, pe3.astype(x3.dtype), dropout_p=0.0, seed=0,
                           apply_dropout=False))
    assert jnp.allclose(out3, ref3, atol=1e-6, rtol=1e-6)

    # 4) bf16 add path.
    xb = x.astype(jnp.bfloat16)
    peb = pe.astype(jnp.bfloat16)
    out_b = jax.block_until_ready(
        _pe_dropout_pallas(xb, peb, dropout_p=0.0, seed=0, apply_dropout=False))
    assert out_b.dtype == jnp.bfloat16
    assert jnp.allclose(out_b.astype(jnp.float32),
                        (xb + peb[None]).astype(jnp.float32), atol=1e-2, rtol=1e-2)

    # 5) Eval-mode forward (dropout is identity; fused XLA add path).
    out_eval = jax.block_until_ready(
        positional_encoding_forward(x, pe, dropout_p=dropout_p, training=False))
    assert out_eval.shape == x.shape and out_eval.dtype == x.dtype
    assert jnp.allclose(out_eval, ref, atol=1e-6, rtol=1e-6)

    # 6) Training-mode forward: every output element is either 0 or ref/(1-p).
    out_train = jax.block_until_ready(
        positional_encoding_forward(x, pe, dropout_p=dropout_p, training=True,
                                    seed=1234))
    scaled = ref / (1.0 - dropout_p)
    is_zero = jnp.isclose(out_train, 0.0, atol=1e-6)
    is_scaled = jnp.isclose(out_train, scaled, atol=1e-5, rtol=1e-5)
    assert bool(jnp.all(is_zero | is_scaled))
    assert bool(jnp.any(is_scaled))                    # most elements are kept

    # 7) Training through the 2-axis grid path (forced tiny budget) as well.
    out_train2 = jax.block_until_ready(
        _pe_dropout_pallas(x2, pe2.astype(x2.dtype), dropout_p=dropout_p,
                           seed=7, apply_dropout=True, budget_bytes=4096))
    scaled2 = ref2 / (1.0 - dropout_p)
    ok2 = (jnp.isclose(out_train2, 0.0, atol=1e-6)
           | jnp.isclose(out_train2, scaled2, atol=1e-5, rtol=1e-5))
    assert bool(jnp.all(ok2))
    assert bool(jnp.any(~jnp.isclose(out_train2, 0.0, atol=1e-6)))

    print("KERNEL_OK")
</pallas_src>

<mosaic_0001>
module attributes {stable_mosaic.version = 11 : i64} {
  func.func @_pe_dropout_kernel(%arg0: i32, %arg1: memref<1xi32, #tpu.memory_space<smem>>, %arg2: memref<4x128xf32, #tpu.memory_space<vmem>>, %arg3: memref<4x128xf32, #tpu.memory_space<vmem>>, %arg4: memref<4x128xf32, #tpu.memory_space<vmem>>) attributes {dimension_semantics = [#tpu.dimension_semantics<parallel>], iteration_bounds = array<i64: 1>, scalar_prefetch = 1 : i64, scratch_operands = 0 : i64, tpu.core_type = #tpu.core_type<tc>, window_params = [{transform_indices = @transform_0, window_bounds = array<i64: 4, 128>}, {pipeline_mode = #tpu.pipeline_mode<synchronous>, transform_indices = @transform_1, window_bounds = array<i64: 4, 128>}, {transform_indices = @transform_2, window_bounds = array<i64: 4, 128>}]} {
    %c0 = arith.constant 0 : index
    %c0_0 = arith.constant 0 : index
    %0 = vector.load %arg2[%c0, %c0_0] : memref<4x128xf32, #tpu.memory_space<vmem>>, vector<4x128xf32>
    %c0_1 = arith.constant 0 : index
    %c0_2 = arith.constant 0 : index
    %1 = vector.load %arg3[%c0_1, %c0_2] : memref<4x128xf32, #tpu.memory_space<vmem>>, vector<4x128xf32>
    %2 = arith.addf %0, %1 : vector<4x128xf32>
    %c0_3 = arith.constant 0 : index
    %c0_4 = arith.constant 0 : index
    %3 = vector.load %arg4[%c0_3, %c0_4] : memref<4x128xf32, #tpu.memory_space<vmem>>, vector<4x128xf32>
    tpu.vector_store %arg4[%c0_3, %c0_4], %2 {strides = array<i32>} : memref<4x128xf32, #tpu.memory_space<vmem>>, vector<4x128xf32>,
    return
  }
  func.func @transform_0(%arg0: i32, %arg1: memref<1xi32, #tpu.memory_space<smem>>) -> (i32, i32) {
    %c0_i32 = arith.constant 0 : i32
    %c0_i32_0 = arith.constant 0 : i32
    return %arg0, %c0_i32 : i32, i32
  }
  func.func @transform_1(%arg0: i32, %arg1: memref<1xi32, #tpu.memory_space<smem>>) -> (i32, i32) {
    %c0_i32 = arith.constant 0 : i32
    %c0_i32_0 = arith.constant 0 : i32
    %c0_i32_1 = arith.constant 0 : i32
    return %c0_i32, %c0_i32_0 : i32, i32
  }
  func.func @transform_2(%arg0: i32, %arg1: memref<1xi32, #tpu.memory_space<smem>>) -> (i32, i32) {
    %c0_i32 = arith.constant 0 : i32
    %c0_i32_0 = arith.constant 0 : i32
    return %arg0, %c0_i32 : i32, i32
  }
}

</mosaic_0001>

<llo_original>
// kernel: tpu_custom_call.1
$region0: #{tpu_custom_call.1}
  #allocation0 [shape = 'u32[]', space=smem, size = 0x4, offset = 0x4, fixed_abs, tag = 'smem constant byte address 0x4 - core index']
  #allocation1 [shape = 'u32[144,128]{1,0:T(1,128)}', space=vmem, size = 0x12000, scoped, tag = 'internal scratch']
  #allocation2 [shape = 's32[1]{0}', space=sflag, size = 0x4, scoped, tag = 'scoped memory for tpu_custom_call.1']
  #allocation3 [shape = 's32[1]{0:T(128)S(6)}', space=smem, size = 0x200, scoped, tag = 'prefetched SMEM operand 0']
  %s0 = inlined_call_operand.<no memory space> [shape: s32[1], index: 0, kind: input, shape index: {}]
  %s1 = inlined_call_operand.hbm [shape: f32[4,128], index: 1, kind: input, shape index: {}]
  %s2 = inlined_call_operand.hbm [shape: f32[4,128], index: 2, kind: input, shape index: {}]
  %s3 = inlined_call_operand.hbm [shape: f32[4,128], index: 3, kind: output, shape index: {}]
  %s4 = sld [smem:[#allocation0]]
  $region26: #{tpu_custom_call.1} parent=0
    _
  %s6 = ssub.s32 1, %s4
  %s7 = scalar_select 0, %s6, %s4
  %8 = sst [smem:[#allocation3]] %s0
  $region1: #{tpu_custom_call.1} parent=0
    #allocation4 [shape = 'u8[2048]{0}', space=vmem, size = 0x800, scoped, tag = 'input window, operand 1, single buffered']
    #allocation5 [shape = 's32[1]{0}', space=sflag, size = 0x4, scoped, tag = 'scoped memory for tpu_custom_call.1']
    #allocation6 [shape = 's32[1]{0}', space=sflag, size = 0x4, scoped, tag = 'scoped memory for tpu_custom_call.1']
    #allocation7 [shape = 'u8[2048]{0}', space=vmem, size = 0x800, scoped, tag = 'input window, operand 2, single buffered']
    #allocation8 [shape = 's32[1]{0}', space=sflag, size = 0x4, scoped, tag = 'scoped memory for tpu_custom_call.1']
    #allocation9 [shape = 'u8[2048]{0}', space=vmem, size = 0x800, scoped, tag = 'output window, operand 0, single buffered']
    %9 = vsyncpa [#allocation5], 0
    %10 = vsyncpa [#allocation8], 0
    %11 = vsyncpa [#allocation6], 0
    // Predicated region
    $region2: #{tpu_custom_call.1} parent=1 // pred_check
      _
    $region3: #{tpu_custom_call.1} parent=1 // pred_check_branch
      %13 = sbr.rel (0) target = $region5
    $region4: #{tpu_custom_call.1} parent=1 // pred_region
      %s15 = ssub.s32 64, 64
      %16 = vsyncadd [#allocation5], %s15
      %s18 = sshll.u32 [#allocation4], 4
      %s19 = int_to_ptr.vmem [resolvable:$true] %s18
      %21 = dma.hbm_to_vmem [thread:$0]  %s1, 64, %s19, [#allocation5]
    $region5: #{tpu_custom_call.1} parent=1 // pred_fallthru
      _
    // Predicated region
    $region6: #{tpu_custom_call.1} parent=1 // pred_check
      _
    $region7: #{tpu_custom_call.1} parent=1 // pred_check_branch
      %23 = sbr.rel (0) target = $region9
    $region8: #{tpu_custom_call.1} parent=1 // pred_region
      %s25 = ssub.s32 64, 64
      %26 = vsyncadd [#allocation8], %s25
      %s28 = sshll.u32 [#allocation7], 4
      %s29 = int_to_ptr.vmem [resolvable:$true] %s28
      %31 = dma.hbm_to_vmem [thread:$0]  %s2, 64, %s29, [#allocation8]
    $region9: #{tpu_custom_call.1} parent=1 // pred_fallthru
      _
    // Predicated region
    $region10: #{tpu_custom_call.1} parent=1 // pred_check
      _
    $region11: #{tpu_custom_call.1} parent=1 // pred_check_branch
      %33 = sbr.rel (0) target = $region13
    $region12: #{tpu_custom_call.1} parent=1 // pred_region
      %34 = dma.done [#allocation5], 64
    $region13: #{tpu_custom_call.1} parent=1 // pred_fallthru
      _
    // Predicated region
    $region14: #{tpu_custom_call.1} parent=1 // pred_check
      _
    $region15: #{tpu_custom_call.1} parent=1 // pred_check_branch
      %36 = sbr.rel (0) target = $region17
    $region16: #{tpu_custom_call.1} parent=1 // pred_region
      %37 = dma.done [#allocation8], 64
    $region17: #{tpu_custom_call.1} parent=1 // pred_fallthru
      _
    %v38 = vld [vmem:[#allocation4] sm:$0xf]
    %v39 = vld [vmem:[#allocation7] sm:$0xf]
    %v40 = vadd.f32 %v38, %v39
    %41 = vst [vmem:[#allocation9] sm:$0xf] %v40
    // Predicated region
    $region18: #{tpu_custom_call.1} parent=1 // pred_check
      _
    $region19: #{tpu_custom_call.1} parent=1 // pred_check_branch
      %43 = sbr.rel (0) target = $region21
    $region20: #{tpu_custom_call.1} parent=1 // pred_region
      %s45 = ssub.s32 64, 64
      %46 = vsyncadd [#allocation6], %s45
      %s48 = sshll.u32 [#allocation9], 4
      %s49 = int_to_ptr.vmem [resolvable:$true] %s48
      %51 = dma.vmem_to_hbm [thread:$0]  %s49, 64, %s3, [#allocation6]
    $region21: #{tpu_custom_call.1} parent=1 // pred_fallthru
      _
    // Predicated region
    $region22: #{tpu_custom_call.1} parent=1 // pred_check
      _
    $region23: #{tpu_custom_call.1} parent=1 // pred_check_branch
      %53 = sbr.rel (0) target = $region25
    $region24: #{tpu_custom_call.1} parent=1 // pred_region
      %54 = dma.done [#allocation6], 64
    $region25: #{tpu_custom_call.1} parent=1 // pred_fallthru
      _
    %55 = vsyncpa [#allocation5], 1
    %56 = vsyncpa [#allocation8], 1
    %57 = vsyncpa [#allocation6], 1

</llo_original>
